<compile_context>
chip_gen: v5e
topology: v5e:2x2
jax: 0.10.0
libtpu: 0.0.40
codegen_flags: <defaults>
</compile_context>

<pallas_src>
import functools

import jax
import jax.numpy as jnp
import numpy as np
from jax.experimental import pallas as pl
from jax.experimental.pallas import tpu as pltpu

EPS = 1e-5


def _banded_conv_weight(w_hwio, W):
    """(3,3,Cin,Cout) HWIO conv weight -> block-banded matrix A of shape (3*W*Cin, W*Cout).

    For lane-dense activation rows r[n, h] in R^{W*Cin} (channel fastest) that are only
    H-zero-padded, a 'SAME' 3x3/stride-1 conv output row is
        out[n, h] = concat_dy(r_pad[n, h + dy]) @ A          (R^{W*Cout}, channel fastest)
    with A[dy*W*Cin + p*Cin + ci, w*Cout + co] = w[dy, p - w + 1, ci, co] when 0 <= p-w+1 < 3
    and 0 otherwise (the W-direction zero padding becomes structural zeros in A).
    """
    KH, KW, Cin, Cout = w_hwio.shape
    blocks = []
    for dy in range(KH):
        a_dy = jnp.zeros((W, Cin, W, Cout), w_hwio.dtype)
        for dx in range(KW):
            # sel[p, w] = 1  iff  p == w + dx - 1   (out-of-range taps clipped == zero pad)
            sel = jnp.eye(W, W, k=1 - dx, dtype=w_hwio.dtype)
            a_dy = a_dy + jnp.einsum("pw,io->piwo", sel, w_hwio[dy, dx])
        blocks.append(a_dy)
    return jnp.stack(blocks, axis=0).reshape(KH * W * Cin, W * Cout)


def _residual_block_kernel(x_ref, res_ref, a1_ref, g1_ref, b1_ref,
                           a2_ref, g2_ref, b2_ref, out_ref, *, N, H, W, Cout):
    """Fused conv3x3 -> BN -> ReLU -> conv3x3 -> BN -> +residual -> ReLU (all lane-dense).

    x_ref   : (N, H+2, W*Cin)   bf16  H-zero-padded lane-dense rows (channel fastest)
    res_ref : (N*H, W*Cin)      f32   exact identity residual, lane-dense
    a*_ref  : (3*W*Cin, W*Cout) bf16  banded conv weights (see _banded_conv_weight)
    g*,b*   : (1, W*Cout)       f32   BN gamma/beta pre-broadcast to the lane layout
    out_ref : (N*H, W*Cout)     f32
    """
    WCo = W * Cout
    inv_cnt = 1.0 / float(N * H * W)

    # 0/1 fold/expand matrices for per-channel <-> lane-dense conversion of BN statistics.
    # Tiny MXU matmuls instead of lane reshapes / tiles; shared by both BN layers.
    fold = (jax.lax.broadcasted_iota(jnp.int32, (WCo, Cout), 0) % Cout ==
            jax.lax.broadcasted_iota(jnp.int32, (WCo, Cout), 1)).astype(jnp.float32)
    expand = (jax.lax.broadcasted_iota(jnp.int32, (Cout, WCo), 0) ==
              jax.lax.broadcasted_iota(jnp.int32, (Cout, WCo), 1) % Cout).astype(jnp.float32)

    def conv_rows(rows_pad, a):
        # rows_pad: (N, H+2, W*Cx) bf16; a: (3*W*Cx, W*Cout) bf16.
        # One matmul per conv: the three dy-shifted row views concatenated along a
        # lane-tile-aligned axis form the LHS; f32 accumulation on the MXU.
        lhs = jnp.concatenate([rows_pad[:, dy:dy + H, :] for dy in range(3)],
                              axis=-1).reshape(N * H, 3 * rows_pad.shape[-1])
        return jnp.dot(lhs, a, preferred_element_type=jnp.float32)   # (N*H, W*Cout) f32

    def bn_train(y, gamma_lane, beta_lane):
        # Training-mode BatchNorm (biased variance), computed in the lane-dense layout.
        # Two-pass (centered) variance avoids E[x^2]-mean^2 cancellation.
        mean_c = jnp.dot(jnp.sum(y, axis=0, keepdims=True), fold) * inv_cnt      # (1, Cout)
        mean_lane = jnp.dot(mean_c, expand)                                       # (1, W*Cout)
        yc = y - mean_lane
        var_c = jnp.dot(jnp.sum(yc * yc, axis=0, keepdims=True), fold) * inv_cnt  # (1, Cout)
        inv_lane = jnp.dot(jax.lax.rsqrt(var_c + EPS), expand)                    # (1, W*Cout)
        return yc * (inv_lane * gamma_lane) + beta_lane

    # ---- conv1 -> BN1 -> ReLU  (conv bias omitted: inert before training-mode BN) ----
    y1 = conv_rows(x_ref[...], a1_ref[...])
    mid = jnp.maximum(bn_train(y1, g1_ref[...], b1_ref[...]), 0.0)   # (N*H, W*Cout) f32

    # ---- re-add the H zero-padding rows for conv2 (value concat; no masked border stores) ----
    mid_rows = jnp.concatenate(
        [jnp.zeros((N, 1, WCo), jnp.bfloat16),
         mid.astype(jnp.bfloat16).reshape(N, H, WCo),
         jnp.zeros((N, 1, WCo), jnp.bfloat16)], axis=1)              # (N, H+2, W*Cout)

    # ---- conv2 -> BN2 -> + identity residual -> ReLU, lane-dense store ----
    y2 = bn_train(conv_rows(mid_rows, a2_ref[...]), g2_ref[...], b2_ref[...])
    out_ref[...] = jnp.maximum(y2 + res_ref[...], 0.0)


def residual_block(x_nchw, params):
    """x_nchw: (N, C, H, W) float32. params: HWIO conv weights + BN gamma/beta."""
    N, C, H, W = x_nchw.shape
    Cout = params["w1"].shape[-1]
    assert C == Cout, "identity residual (downsample=None) requires Cin == Cout"
    # NOTE: W*C is chosen to be a multiple of 128 so everything runs fully lane-dense.

    x_nhwc = jnp.transpose(x_nchw, (0, 2, 3, 1))                     # (N, H, W, C) f32
    residual = x_nhwc.reshape(N * H, W * C)                          # exact f32 residual
    x_rows = jnp.pad(x_nhwc, ((0, 0), (1, 1), (0, 0), (0, 0)))       # H padding only
    x_rows = x_rows.reshape(N, H + 2, W * C).astype(jnp.bfloat16)    # bf16: half the DMA bytes

    a1 = _banded_conv_weight(params["w1"], W).astype(jnp.bfloat16)   # (3*W*C, W*Cout)
    a2 = _banded_conv_weight(params["w2"], W).astype(jnp.bfloat16)
    g1 = jnp.tile(params["g1"].reshape(1, Cout), (1, W)).astype(jnp.float32)
    b1 = jnp.tile(params["be1"].reshape(1, Cout), (1, W)).astype(jnp.float32)
    g2 = jnp.tile(params["g2"].reshape(1, Cout), (1, W)).astype(jnp.float32)
    b2 = jnp.tile(params["be2"].reshape(1, Cout), (1, W)).astype(jnp.float32)

    # All buffers are tiny (< 0.5 MiB total); request a limit that is safe on every
    # generation: <= 32 MiB and <= half of physical VMEM (v7x has only 64 MiB per core).
    try:
        vmem_cap = pltpu.get_tpu_info().vmem_capacity_bytes
    except Exception:
        vmem_cap = 64 * 2**20
    vmem_limit = int(min(32 * 2**20, vmem_cap // 2))

    K = a1.shape[0]
    flops = 2 * 2 * (N * H) * K * (W * Cout)                         # two banded MXU matmuls
    bytes_accessed = int((x_rows.size + a1.size + a2.size) * 2
                         + (residual.size + N * H * W * Cout + 4 * W * Cout) * 4)

    vspec = pl.BlockSpec(memory_space=pltpu.MemorySpace.VMEM)
    kernel = functools.partial(_residual_block_kernel, N=N, H=H, W=W, Cout=Cout)
    out_flat = pl.pallas_call(
        kernel,
        out_shape=jax.ShapeDtypeStruct((N * H, W * Cout), jnp.float32),
        in_specs=[vspec] * 8,
        out_specs=vspec,
        compiler_params=pltpu.CompilerParams(vmem_limit_bytes=vmem_limit),
        cost_estimate=pl.CostEstimate(flops=flops, transcendentals=0,
                                      bytes_accessed=bytes_accessed),
    )(x_rows, residual, a1, g1, b1, a2, g2, b2)

    out = out_flat.reshape(N, H, W, Cout)
    return jnp.transpose(out, (0, 3, 1, 2))


def _reference(x_nchw, params):
    """Pure-JAX f32 reference with identical semantics (includes the inert conv biases)."""
    def conv3x3(x, w, b):
        y = jax.lax.conv_general_dilated(
            x, w, window_strides=(1, 1), padding="SAME",
            dimension_numbers=("NHWC", "HWIO", "NHWC"))
        return y + b.reshape(1, 1, 1, -1)

    def bn_train(x, g, b):
        m = jnp.mean(x, axis=(0, 1, 2), keepdims=True)
        v = jnp.mean((x - m) ** 2, axis=(0, 1, 2), keepdims=True)
        return (x - m) / jnp.sqrt(v + EPS) * g.reshape(1, 1, 1, -1) + b.reshape(1, 1, 1, -1)

    x = jnp.transpose(x_nchw, (0, 2, 3, 1))
    out = jnp.maximum(bn_train(conv3x3(x, params["w1"], params["b1"]),
                               params["g1"], params["be1"]), 0.0)
    out = bn_train(conv3x3(out, params["w2"], params["b2"]),
                   params["g2"], params["be2"])
    out = jnp.maximum(out + x, 0.0)
    return jnp.transpose(out, (0, 3, 1, 2))


if __name__ == "__main__":
    # C chosen so that W*C == 128 (fully lane-dense) and the identity residual is valid.
    N, C, H, W = 2, 8, 16, 16
    key = jax.random.PRNGKey(0)
    kx, k1, k2, kb1, kb2, kg1, kg2, kbe1, kbe2 = jax.random.split(key, 9)

    x = jax.random.normal(kx, (N, C, H, W), dtype=jnp.float32)
    params = {
        # conv weights in HWIO layout: (3, 3, C_in, C_out)
        "w1": jax.random.normal(k1, (3, 3, C, C), jnp.float32) * 0.1,
        "b1": jax.random.normal(kb1, (C,), jnp.float32) * 0.1,
        "g1": 1.0 + 0.1 * jax.random.normal(kg1, (C,), jnp.float32),
        "be1": 0.1 * jax.random.normal(kbe1, (C,), jnp.float32),
        "w2": jax.random.normal(k2, (3, 3, C, C), jnp.float32) * 0.1,
        "b2": jax.random.normal(kb2, (C,), jnp.float32) * 0.1,
        "g2": 1.0 + 0.1 * jax.random.normal(kg2, (C,), jnp.float32),
        "be2": 0.1 * jax.random.normal(kbe2, (C,), jnp.float32),
    }

    out = jax.block_until_ready(residual_block(x, params))
    ref = jax.block_until_ready(_reference(x, params))
    # Tolerance accounts for bf16 MXU operands (f32 accumulation) inside the kernel.
    np.testing.assert_allclose(np.asarray(out), np.asarray(ref), atol=2e-2, rtol=2e-2)
    print("KERNEL_OK")
</pallas_src>

<mosaic_0001>
module attributes {stable_mosaic.version = 11 : i64} {
  func.func @_residual_block_kernel(%arg0: memref<2x18x128xbf16, #tpu.memory_space<vmem>>, %arg1: memref<32x128xf32, #tpu.memory_space<vmem>>, %arg2: memref<384x128xbf16, #tpu.memory_space<vmem>>, %arg3: memref<1x128xf32, #tpu.memory_space<vmem>>, %arg4: memref<1x128xf32, #tpu.memory_space<vmem>>, %arg5: memref<384x128xbf16, #tpu.memory_space<vmem>>, %arg6: memref<1x128xf32, #tpu.memory_space<vmem>>, %arg7: memref<1x128xf32, #tpu.memory_space<vmem>>, %arg8: memref<32x128xf32, #tpu.memory_space<vmem>>) attributes {dimension_semantics = [], scalar_prefetch = 0 : i64, scratch_operands = 0 : i64, tpu.core_type = #tpu.core_type<tc>} {
    %0 = tpu.iota {dimensions = array<i32: 0>} : vector<128x8xi32>
    %c8_i32 = arith.constant 8 : i32
    %c0_i32 = arith.constant 0 : i32
    %1 = arith.cmpi eq, %c8_i32, %c0_i32 : i32
    %c1_i32 = arith.constant 1 : i32
    %2 = arith.select %1, %c1_i32, %c8_i32 : i32
    %3 = vector.broadcast %2 : i32 to vector<128x8xi32>
    %4 = arith.remsi %0, %3 : vector<128x8xi32>
    %c0_i32_0 = arith.constant 0 : i32
    %5 = vector.broadcast %c0_i32_0 : i32 to vector<128x8xi32>
    %6 = arith.cmpi ne, %4, %5 : vector<128x8xi32>
    %c0_i32_1 = arith.constant 0 : i32
    %7 = vector.broadcast %c0_i32_1 : i32 to vector<128x8xi32>
    %8 = arith.cmpi slt, %4, %7 : vector<128x8xi32>
    %c0_i32_2 = arith.constant 0 : i32
    %9 = arith.cmpi slt, %2, %c0_i32_2 : i32
    %10 = vector.broadcast %9 : i1 to vector<128x8xi1>
    %11 = vector.broadcast %10 : vector<128x8xi1> to vector<128x8xi1>
    %12 = arith.xori %8, %11 : vector<128x8xi1>
    %13 = arith.andi %12, %6 : vector<128x8xi1>
    %14 = vector.broadcast %2 : i32 to vector<128x8xi32>
    %15 = arith.addi %4, %14 : vector<128x8xi32>
    %16 = arith.select %13, %15, %4 : vector<128x8xi1>, vector<128x8xi32>
    %17 = tpu.iota {dimensions = array<i32: 1>} : vector<128x8xi32>
    %18 = arith.cmpi eq, %16, %17 : vector<128x8xi32>
    %19 = arith.extui %18 : vector<128x8xi1> to vector<128x8xi32>
    %20 = arith.sitofp %19 : vector<128x8xi32> to vector<128x8xf32>
    %21 = tpu.iota {dimensions = array<i32: 0>} : vector<8x128xi32>
    %22 = tpu.iota {dimensions = array<i32: 1>} : vector<8x128xi32>
    %c8_i32_3 = arith.constant 8 : i32
    %c0_i32_4 = arith.constant 0 : i32
    %23 = arith.cmpi eq, %c8_i32_3, %c0_i32_4 : i32
    %c1_i32_5 = arith.constant 1 : i32
    %24 = arith.select %23, %c1_i32_5, %c8_i32_3 : i32
    %25 = vector.broadcast %24 : i32 to vector<8x128xi32>
    %26 = arith.remsi %22, %25 : vector<8x128xi32>
    %c0_i32_6 = arith.constant 0 : i32
    %27 = vector.broadcast %c0_i32_6 : i32 to vector<8x128xi32>
    %28 = arith.cmpi ne, %26, %27 : vector<8x128xi32>
    %c0_i32_7 = arith.constant 0 : i32
    %29 = vector.broadcast %c0_i32_7 : i32 to vector<8x128xi32>
    %30 = arith.cmpi slt, %26, %29 : vector<8x128xi32>
    %c0_i32_8 = arith.constant 0 : i32
    %31 = arith.cmpi slt, %24, %c0_i32_8 : i32
    %32 = vector.broadcast %31 : i1 to vector<8x128xi1>
    %33 = vector.broadcast %32 : vector<8x128xi1> to vector<8x128xi1>
    %34 = arith.xori %30, %33 : vector<8x128xi1>
    %35 = arith.andi %34, %28 : vector<8x128xi1>
    %36 = vector.broadcast %24 : i32 to vector<8x128xi32>
    %37 = arith.addi %26, %36 : vector<8x128xi32>
    %38 = arith.select %35, %37, %26 : vector<8x128xi1>, vector<8x128xi32>
    %39 = arith.cmpi eq, %21, %38 : vector<8x128xi32>
    %40 = arith.extui %39 : vector<8x128xi1> to vector<8x128xi32>
    %41 = arith.sitofp %40 : vector<8x128xi32> to vector<8x128xf32>
    %c0 = arith.constant 0 : index
    %c0_9 = arith.constant 0 : index
    %c0_10 = arith.constant 0 : index
    %42 = vector.load %arg0[%c0, %c0_9, %c0_10] : memref<2x18x128xbf16, #tpu.memory_space<vmem>>, vector<2x18x128xbf16>
    %c0_11 = arith.constant 0 : index
    %c0_12 = arith.constant 0 : index
    %43 = vector.load %arg2[%c0_11, %c0_12] : memref<384x128xbf16, #tpu.memory_space<vmem>>, vector<384x128xbf16>
    %44 = vector.extract_strided_slice %42 {offsets = [0, 0, 0], sizes = [2, 16, 128], strides = [1, 1, 1]} : vector<2x18x128xbf16> to vector<2x16x128xbf16>
    %45 = vector.extract_strided_slice %42 {offsets = [0, 1, 0], sizes = [2, 16, 128], strides = [1, 1, 1]} : vector<2x18x128xbf16> to vector<2x16x128xbf16>
    %46 = vector.extract_strided_slice %42 {offsets = [0, 2, 0], sizes = [2, 16, 128], strides = [1, 1, 1]} : vector<2x18x128xbf16> to vector<2x16x128xbf16>
    %47 = tpu.concatenate %44, %45, %46 in 2 : vector<2x16x128xbf16>, vector<2x16x128xbf16>, vector<2x16x128xbf16> -> vector<2x16x384xbf16>
    %48 = vector.shape_cast %47 : vector<2x16x384xbf16> to vector<32x384xbf16>
    %cst = arith.constant dense<0.000000e+00> : vector<32x128xf32>
    %49 = tpu.matmul %48, %43, %cst {dimension_numbers = #tpu.dot_dimension_numbers<[1], [0], [0], [1], [0, 0, 1, 1], [], []>} : vector<32x384xbf16>, vector<384x128xbf16>, vector<32x128xf32> -> vector<32x128xf32>
    %c0_13 = arith.constant 0 : index
    %c0_14 = arith.constant 0 : index
    %50 = vector.load %arg3[%c0_13, %c0_14] : memref<1x128xf32, #tpu.memory_space<vmem>>, vector<1x128xf32>
    %c0_15 = arith.constant 0 : index
    %c0_16 = arith.constant 0 : index
    %51 = vector.load %arg4[%c0_15, %c0_16] : memref<1x128xf32, #tpu.memory_space<vmem>>, vector<1x128xf32>
    %cst_17 = arith.constant dense<0.000000e+00> : vector<128xf32>
    %52 = vector.multi_reduction <add>, %49, %cst_17 [0] : vector<32x128xf32> to vector<128xf32>
    %53 = vector.shape_cast %52 : vector<128xf32> to vector<1x128xf32>
    %cst_18 = arith.constant dense<0.000000e+00> : vector<1x8xf32>
    %54 = tpu.matmul %53, %20, %cst_18 {dimension_numbers = #tpu.dot_dimension_numbers<[1], [0], [0], [1], [0, 0, 1, 1], [], []>} : vector<1x128xf32>, vector<128x8xf32>, vector<1x8xf32> -> vector<1x8xf32>
    %cst_19 = arith.constant 0.001953125 : f32
    %55 = vector.broadcast %cst_19 : f32 to vector<1x8xf32>
    %56 = arith.mulf %54, %55 : vector<1x8xf32>
    %cst_20 = arith.constant dense<0.000000e+00> : vector<1x128xf32>
    %57 = tpu.matmul %56, %41, %cst_20 {dimension_numbers = #tpu.dot_dimension_numbers<[1], [0], [0], [1], [0, 0, 1, 1], [], []>} : vector<1x8xf32>, vector<8x128xf32>, vector<1x128xf32> -> vector<1x128xf32>
    %58 = vector.broadcast %57 : vector<1x128xf32> to vector<32x128xf32>
    %59 = arith.subf %49, %58 : vector<32x128xf32>
    %60 = arith.mulf %59, %59 : vector<32x128xf32>
    %cst_21 = arith.constant dense<0.000000e+00> : vector<128xf32>
    %61 = vector.multi_reduction <add>, %60, %cst_21 [0] : vector<32x128xf32> to vector<128xf32>
    %62 = vector.shape_cast %61 : vector<128xf32> to vector<1x128xf32>
    %cst_22 = arith.constant dense<0.000000e+00> : vector<1x8xf32>
    %63 = tpu.matmul %62, %20, %cst_22 {dimension_numbers = #tpu.dot_dimension_numbers<[1], [0], [0], [1], [0, 0, 1, 1], [], []>} : vector<1x128xf32>, vector<128x8xf32>, vector<1x8xf32> -> vector<1x8xf32>
    %cst_23 = arith.constant 0.001953125 : f32
    %64 = vector.broadcast %cst_23 : f32 to vector<1x8xf32>
    %65 = arith.mulf %63, %64 : vector<1x8xf32>
    %cst_24 = arith.constant 9.99999974E-6 : f32
    %66 = vector.broadcast %cst_24 : f32 to vector<1x8xf32>
    %67 = arith.addf %65, %66 : vector<1x8xf32>
    %68 = math.rsqrt %67 : vector<1x8xf32>
    %cst_25 = arith.constant dense<0.000000e+00> : vector<1x128xf32>
    %69 = tpu.matmul %68, %41, %cst_25 {dimension_numbers = #tpu.dot_dimension_numbers<[1], [0], [0], [1], [0, 0, 1, 1], [], []>} : vector<1x8xf32>, vector<8x128xf32>, vector<1x128xf32> -> vector<1x128xf32>
    %70 = arith.mulf %69, %50 : vector<1x128xf32>
    %71 = vector.broadcast %70 : vector<1x128xf32> to vector<32x128xf32>
    %72 = arith.mulf %59, %71 : vector<32x128xf32>
    %73 = vector.broadcast %51 : vector<1x128xf32> to vector<32x128xf32>
    %74 = arith.addf %72, %73 : vector<32x128xf32>
    %cst_26 = arith.constant 0.000000e+00 : f32
    %75 = vector.broadcast %cst_26 : f32 to vector<32x128xf32>
    %76 = arith.maximumf %74, %75 : vector<32x128xf32>
    %cst_27 = arith.constant 0.000000e+00 : bf16
    %77 = vector.broadcast %cst_27 : bf16 to vector<2x1x128xbf16>
    %78 = arith.truncf %76 : vector<32x128xf32> to vector<32x128xbf16>
    %79 = vector.shape_cast %78 : vector<32x128xbf16> to vector<2x16x128xbf16>
    %cst_28 = arith.constant 0.000000e+00 : bf16
    %80 = vector.broadcast %cst_28 : bf16 to vector<2x1x128xbf16>
    %81 = tpu.concatenate %77, %79, %80 in 1 : vector<2x1x128xbf16>, vector<2x16x128xbf16>, vector<2x1x128xbf16> -> vector<2x18x128xbf16>
    %c0_29 = arith.constant 0 : index
    %c0_30 = arith.constant 0 : index
    %82 = vector.load %arg5[%c0_29, %c0_30] : memref<384x128xbf16, #tpu.memory_space<vmem>>, vector<384x128xbf16>
    %83 = vector.extract_strided_slice %81 {offsets = [0, 0, 0], sizes = [2, 16, 128], strides = [1, 1, 1]} : vector<2x18x128xbf16> to vector<2x16x128xbf16>
    %84 = vector.extract_strided_slice %81 {offsets = [0, 1, 0], sizes = [2, 16, 128], strides = [1, 1, 1]} : vector<2x18x128xbf16> to vector<2x16x128xbf16>
    %85 = vector.extract_strided_slice %81 {offsets = [0, 2, 0], sizes = [2, 16, 128], strides = [1, 1, 1]} : vector<2x18x128xbf16> to vector<2x16x128xbf16>
    %86 = tpu.concatenate %83, %84, %85 in 2 : vector<2x16x128xbf16>, vector<2x16x128xbf16>, vector<2x16x128xbf16> -> vector<2x16x384xbf16>
    %87 = vector.shape_cast %86 : vector<2x16x384xbf16> to vector<32x384xbf16>
    %cst_31 = arith.constant dense<0.000000e+00> : vector<32x128xf32>
    %88 = tpu.matmul %87, %82, %cst_31 {dimension_numbers = #tpu.dot_dimension_numbers<[1], [0], [0], [1], [0, 0, 1, 1], [], []>} : vector<32x384xbf16>, vector<384x128xbf16>, vector<32x128xf32> -> vector<32x128xf32>
    %c0_32 = arith.constant 0 : index
    %c0_33 = arith.constant 0 : index
    %89 = vector.load %arg6[%c0_32, %c0_33] : memref<1x128xf32, #tpu.memory_space<vmem>>, vector<1x128xf32>
    %c0_34 = arith.constant 0 : index
    %c0_35 = arith.constant 0 : index
    %90 = vector.load %arg7[%c0_34, %c0_35] : memref<1x128xf32, #tpu.memory_space<vmem>>, vector<1x128xf32>
    %cst_36 = arith.constant dense<0.000000e+00> : vector<128xf32>
    %91 = vector.multi_reduction <add>, %88, %cst_36 [0] : vector<32x128xf32> to vector<128xf32>
    %92 = vector.shape_cast %91 : vector<128xf32> to vector<1x128xf32>
    %cst_37 = arith.constant dense<0.000000e+00> : vector<1x8xf32>
    %93 = tpu.matmul %92, %20, %cst_37 {dimension_numbers = #tpu.dot_dimension_numbers<[1], [0], [0], [1], [0, 0, 1, 1], [], []>} : vector<1x128xf32>, vector<128x8xf32>, vector<1x8xf32> -> vector<1x8xf32>
    %cst_38 = arith.constant 0.001953125 : f32
    %94 = vector.broadcast %cst_38 : f32 to vector<1x8xf32>
    %95 = arith.mulf %93, %94 : vector<1x8xf32>
    %cst_39 = arith.constant dense<0.000000e+00> : vector<1x128xf32>
    %96 = tpu.matmul %95, %41, %cst_39 {dimension_numbers = #tpu.dot_dimension_numbers<[1], [0], [0], [1], [0, 0, 1, 1], [], []>} : vector<1x8xf32>, vector<8x128xf32>, vector<1x128xf32> -> vector<1x128xf32>
    %97 = vector.broadcast %96 : vector<1x128xf32> to vector<32x128xf32>
    %98 = arith.subf %88, %97 : vector<32x128xf32>
    %99 = arith.mulf %98, %98 : vector<32x128xf32>
    %cst_40 = arith.constant dense<0.000000e+00> : vector<128xf32>
    %100 = vector.multi_reduction <add>, %99, %cst_40 [0] : vector<32x128xf32> to vector<128xf32>
    %101 = vector.shape_cast %100 : vector<128xf32> to vector<1x128xf32>
    %cst_41 = arith.constant dense<0.000000e+00> : vector<1x8xf32>
    %102 = tpu.matmul %101, %20, %cst_41 {dimension_numbers = #tpu.dot_dimension_numbers<[1], [0], [0], [1], [0, 0, 1, 1], [], []>} : vector<1x128xf32>, vector<128x8xf32>, vector<1x8xf32> -> vector<1x8xf32>
    %cst_42 = arith.constant 0.001953125 : f32
    %103 = vector.broadcast %cst_42 : f32 to vector<1x8xf32>
    %104 = arith.mulf %102, %103 : vector<1x8xf32>
    %cst_43 = arith.constant 9.99999974E-6 : f32
    %105 = vector.broadcast %cst_43 : f32 to vector<1x8xf32>
    %106 = arith.addf %104, %105 : vector<1x8xf32>
    %107 = math.rsqrt %106 : vector<1x8xf32>
    %cst_44 = arith.constant dense<0.000000e+00> : vector<1x128xf32>
    %108 = tpu.matmul %107, %41, %cst_44 {dimension_numbers = #tpu.dot_dimension_numbers<[1], [0], [0], [1], [0, 0, 1, 1], [], []>} : vector<1x8xf32>, vector<8x128xf32>, vector<1x128xf32> -> vector<1x128xf32>
    %109 = arith.mulf %108, %89 : vector<1x128xf32>
    %110 = vector.broadcast %109 : vector<1x128xf32> to vector<32x128xf32>
    %111 = arith.mulf %98, %110 : vector<32x128xf32>
    %112 = vector.broadcast %90 : vector<1x128xf32> to vector<32x128xf32>
    %113 = arith.addf %111, %112 : vector<32x128xf32>
    %c0_45 = arith.constant 0 : index
    %c0_46 = arith.constant 0 : index
    %114 = vector.load %arg1[%c0_45, %c0_46] : memref<32x128xf32, #tpu.memory_space<vmem>>, vector<32x128xf32>
    %115 = arith.addf %113, %114 : vector<32x128xf32>
    %cst_47 = arith.constant 0.000000e+00 : f32
    %116 = vector.broadcast %cst_47 : f32 to vector<32x128xf32>
    %117 = arith.maximumf %115, %116 : vector<32x128xf32>
    %c0_48 = arith.constant 0 : index
    %c0_49 = arith.constant 0 : index
    %118 = vector.load %arg8[%c0_48, %c0_49] : memref<32x128xf32, #tpu.memory_space<vmem>>, vector<32x128xf32>
    tpu.vector_store %arg8[%c0_48, %c0_49], %117 {strides = array<i32>} : memref<32x128xf32, #tpu.memory_space<vmem>>, vector<32x128xf32>,
    return
  }
}

</mosaic_0001>

<llo_original>
// kernel: tpu_custom_call.1
$region0: #{tpu_custom_call.1}
  #allocation0 [shape = 'u32[]', space=smem, size = 0x4, offset = 0x4, fixed_abs, tag = 'smem constant byte address 0x4 - core index']
  #allocation1 [shape = 'u32[72,128]{1,0:T(1,128)}', space=vmem, size = 0x9000, scoped, tag = 'internal scratch']
  %s0 = inlined_call_operand.vmem [shape: bf16[2,18,128], index: 0, kind: input, shape index: {}]
  %s1 = inlined_call_operand.vmem [shape: f32[32,128], index: 1, kind: input, shape index: {}]
  %s2 = inlined_call_operand.hbm [shape: bf16[384,128], index: 2, kind: input, shape index: {}]
  %s3 = inlined_call_operand.vmem [shape: f32[1,128], index: 3, kind: input, shape index: {}]
  %s4 = inlined_call_operand.vmem [shape: f32[1,128], index: 4, kind: input, shape index: {}]
  %s5 = inlined_call_operand.hbm [shape: bf16[384,128], index: 5, kind: input, shape index: {}]
  %s6 = inlined_call_operand.vmem [shape: f32[1,128], index: 6, kind: input, shape index: {}]
  %s7 = inlined_call_operand.vmem [shape: f32[1,128], index: 7, kind: input, shape index: {}]
  %s8 = inlined_call_operand.hbm [shape: f32[32,128], index: 8, kind: output, shape index: {}]
  %s9 = sld [smem:[#allocation0]]
  $region50: #{tpu_custom_call.1} parent=0
    _
  %s11 = ssub.s32 1, %s9
  %s12 = scalar_select 0, %s11, %s9
  $region1: #{tpu_custom_call.1} parent=0
    #allocation2 [shape = 'u8[98304]{0}', space=vmem, size = 0x18000, scoped, tag = 'input window, operand 2, single buffered']
    #allocation3 [shape = 's32[1]{0}', space=sflag, size = 0x4, scoped, tag = 'scoped memory for tpu_custom_call.1']
    #allocation4 [shape = 's32[1]{0}', space=sflag, size = 0x4, scoped, tag = 'scoped memory for tpu_custom_call.1']
    #allocation5 [shape = 'u8[98304]{0}', space=vmem, size = 0x18000, scoped, tag = 'input window, operand 5, single buffered']
    #allocation6 [shape = 's32[1]{0}', space=sflag, size = 0x4, scoped, tag = 'scoped memory for tpu_custom_call.1']
    #allocation7 [shape = 'u8[16384]{0}', space=vmem, size = 0x4000, scoped, tag = 'output window, operand 0, single buffered']
    %13 = vsyncpa [#allocation3], 0
    %14 = vsyncpa [#allocation6], 0
    %15 = vsyncpa [#allocation4], 0
    // Predicated region
    $region2: #{tpu_custom_call.1} parent=1 // pred_check
      _
    $region3: #{tpu_custom_call.1} parent=1 // pred_check_branch
      %17 = sbr.rel (0) target = $region5
    $region4: #{tpu_custom_call.1} parent=1 // pred_region
      _
    $region5: #{tpu_custom_call.1} parent=1 // pred_fallthru
      _
    // Predicated region
    $region6: #{tpu_custom_call.1} parent=1 // pred_check
      _
    $region7: #{tpu_custom_call.1} parent=1 // pred_check_branch
      %19 = sbr.rel (0) target = $region9
    $region8: #{tpu_custom_call.1} parent=1 // pred_region
      _
    $region9: #{tpu_custom_call.1} parent=1 // pred_fallthru
      _
    // Predicated region
    $region10: #{tpu_custom_call.1} parent=1 // pred_check
      _
    $region11: #{tpu_custom_call.1} parent=1 // pred_check_branch
      %21 = sbr.rel (0) target = $region13
    $region12: #{tpu_custom_call.1} parent=1 // pred_region
      %23 = vsyncadd [#allocation3], 0
      %s24 = sshll.u32 %s2, 4
      %s25 = int_to_ptr.hbm [resolvable:$true] %s24
      %s26 = sshll.u32 [#allocation2], 4
      %s27 = int_to_ptr.vmem [resolvable:$true] %s26
      %32 = dma.hbm_to_vmem [thread:$0]  %s25, 3072, %s27, [#allocation3], 64, 64, 4
    $region13: #{tpu_custom_call.1} parent=1 // pred_fallthru
      _
    // Predicated region
    $region14: #{tpu_custom_call.1} parent=1 // pred_check
      _
    $region15: #{tpu_custom_call.1} parent=1 // pred_check_branch
      %34 = sbr.rel (0) target = $region17
    $region16: #{tpu_custom_call.1} parent=1 // pred_region
      _
    $region17: #{tpu_custom_call.1} parent=1 // pred_fallthru
      _
    // Predicated region
    $region18: #{tpu_custom_call.1} parent=1 // pred_check
      _
    $region19: #{tpu_custom_call.1} parent=1 // pred_check_branch
      %36 = sbr.rel (0) target = $region21
    $region20: #{tpu_custom_call.1} parent=1 // pred_region
      _
    $region21: #{tpu_custom_call.1} parent=1 // pred_fallthru
      _
    // Predicated region
    $region22: #{tpu_custom_call.1} parent=1 // pred_check
      _
    $region23: #{tpu_custom_call.1} parent=1 // pred_check_branch
      %38 = sbr.rel (0) target = $region25
    $region24: #{tpu_custom_call.1} parent=1 // pred_region
      %40 = vsyncadd [#allocation6], 0
      %s41 = sshll.u32 %s5, 4
      %s42 = int_to_ptr.hbm [resolvable:$true] %s41
      %s43 = sshll.u32 [#allocation5], 4
      %s44 = int_to_ptr.vmem [resolvable:$true] %s43
      %49 = dma.hbm_to_vmem [thread:$0]  %s42, 3072, %s44, [#allocation6], 64, 64, 4
    $region25: #{tpu_custom_call.1} parent=1 // pred_fallthru
      _
    // Predicated region
    $region26: #{tpu_custom_call.1} parent=1 // pred_check
      _
    $region27: #{tpu_custom_call.1} parent=1 // pred_check_branch
      %51 = sbr.rel (0) target = $region29
    $region28: #{tpu_custom_call.1} parent=1 // pred_region
      _
    $region29: #{tpu_custom_call.1} parent=1 // pred_fallthru
      _
    // Predicated region
    $region30: #{tpu_custom_call.1} parent=1 // pred_check
      _
    $region31: #{tpu_custom_call.1} parent=1 // pred_check_branch
      %53 = sbr.rel (0) target = $region33
    $region32: #{tpu_custom_call.1} parent=1 // pred_region
      _
    $region33: #{tpu_custom_call.1} parent=1 // pred_fallthru
      _
    // Predicated region
    $region34: #{tpu_custom_call.1} parent=1 // pred_check
      _
    $region35: #{tpu_custom_call.1} parent=1 // pred_check_branch
      %55 = sbr.rel (0) target = $region37
    $region36: #{tpu_custom_call.1} parent=1 // pred_region
      %57 = dma.done [#allocation3], 3072
    $region37: #{tpu_custom_call.1} parent=1 // pred_fallthru
      _
    // Predicated region
    $region38: #{tpu_custom_call.1} parent=1 // pred_check
      _
    $region39: #{tpu_custom_call.1} parent=1 // pred_check_branch
      %59 = sbr.rel (0) target = $region41
    $region40: #{tpu_custom_call.1} parent=1 // pred_region
      %61 = dma.done [#allocation6], 3072
    $region41: #{tpu_custom_call.1} parent=1 // pred_fallthru
      _
    %v63 = vlaneseq
    %v64 = vshrl.u32 %v63, 7
    %v65 = vadd.s32 %v64, 8
    %v66 = vadd.s32 %v64, 16
    %v67 = vadd.s32 %v64, 24
    %v68 = vadd.s32 %v64, 32
    %v69 = vadd.s32 %v64, 40
    %v70 = vadd.s32 %v64, 48
    %v71 = vadd.s32 %v64, 56
    %v72 = vadd.s32 %v64, 64
    %v73 = vadd.s32 %v64, 72
    %v74 = vadd.s32 %v64, 80
    %v75 = vadd.s32 %v64, 88
    %v76 = vadd.s32 %v64, 96
    %v77 = vadd.s32 %v64, 104
    %v78 = vadd.s32 %v64, 112
    %v79 = vadd.s32 %v64, 120
    %vm80 = vcmp.lt.s32.totalorder %v64, 0
    %v81 = vsub.s32 0, %v64
    %v82 = vsel %vm80, %v81, %v64
    %v83 = vshrl.u32 %v82, 3
    %v84 = vand.u32 %v82, 7
    %v85 = vsub.s32 0, %v84
    %v86 = vsel %vm80, %v85, %v84
    %vm87 = vcmp.lt.s32.totalorder %v65, 0
    %v88 = vsub.s32 0, %v65
    %v89 = vsel %vm87, %v88, %v65
    %v90 = vshrl.u32 %v89, 3
    %v91 = vand.u32 %v89, 7
    %v92 = vsub.s32 0, %v91
    %v93 = vsel %vm87, %v92, %v91
    %vm94 = vcmp.lt.s32.totalorder %v66, 0
    %v95 = vsub.s32 0, %v66
    %v96 = vsel %vm94, %v95, %v66
    %v97 = vshrl.u32 %v96, 3
    %v98 = vand.u32 %v96, 7
    %v99 = vsub.s32 0, %v98
    %v100 = vsel %vm94, %v99, %v98
    %vm101 = vcmp.lt.s32.totalorder %v67, 0
    %v102 = vsub.s32 0, %v67
    %v103 = vsel %vm101, %v102, %v67
    %v104 = vshrl.u32 %v103, 3
    %v105 = vand.u32 %v103, 7
    %v106 = vsub.s32 0, %v105
    %v107 = vsel %vm101, %v106, %v105
    %vm108 = vcmp.lt.s32.totalorder %v68, 0
    %v109 = vsub.s32 0, %v68
    %v110 = vsel %vm108, %v109, %v68
    %v111 = vshrl.u32 %v110, 3
    %v112 = vand.u32 %v110, 7
    %v113 = vsub.s32 0, %v112
    %v114 = vsel %vm108, %v113, %v112
    %vm115 = vcmp.lt.s32.totalorder %v69, 0
    %v116 = vsub.s32 0, %v69
    %v117 = vsel %vm115, %v116, %v69
    %v118 = vshrl.u32 %v117, 3
    %v119 = vand.u32 %v117, 7
    %v120 = vsub.s32 0, %v119
    %v121 = vsel %vm115, %v120, %v119
    %vm122 = vcmp.lt.s32.totalorder %v70, 0
    %v123 = vsub.s32 0, %v70
    %v124 = vsel %vm122, %v123, %v70
    %v125 = vshrl.u32 %v124, 3
    %v126 = vand.u32 %v124, 7
    %v127 = vsub.s32 0, %v126
    %v128 = vsel %vm122, %v127, %v126
    %vm129 = vcmp.lt.s32.totalorder %v71, 0
    %v130 = vsub.s32 0, %v71
    %v131 = vsel %vm129, %v130, %v71
    %v132 = vshrl.u32 %v131, 3
    %v133 = vand.u32 %v131, 7
    %v134 = vsub.s32 0, %v133
    %v135 = vsel %vm129, %v134, %v133
    %vm136 = vcmp.lt.s32.totalorder %v72, 0
    %v137 = vsub.s32 0, %v72
    %v138 = vsel %vm136, %v137, %v72
    %v139 = vshrl.u32 %v138, 3
    %v140 = vand.u32 %v138, 7
    %v141 = vsub.s32 0, %v140
    %v142 = vsel %vm136, %v141, %v140
    %vm143 = vcmp.lt.s32.totalorder %v73, 0
    %v144 = vsub.s32 0, %v73
    %v145 = vsel %vm143, %v144, %v73
    %v146 = vshrl.u32 %v145, 3
    %v147 = vand.u32 %v145, 7
    %v148 = vsub.s32 0, %v147
    %v149 = vsel %vm143, %v148, %v147
    %vm150 = vcmp.lt.s32.totalorder %v74, 0
    %v151 = vsub.s32 0, %v74
    %v152 = vsel %vm150, %v151, %v74
    %v153 = vshrl.u32 %v152, 3
    %v154 = vand.u32 %v152, 7
    %v155 = vsub.s32 0, %v154
    %v156 = vsel %vm150, %v155, %v154
    %vm157 = vcmp.lt.s32.totalorder %v75, 0
    %v158 = vsub.s32 0, %v75
    %v159 = vsel %vm157, %v158, %v75
    %v160 = vshrl.u32 %v159, 3
    %v161 = vand.u32 %v159, 7
    %v162 = vsub.s32 0, %v161
    %v163 = vsel %vm157, %v162, %v161
    %vm164 = vcmp.lt.s32.totalorder %v76, 0
    %v165 = vsub.s32 0, %v76
    %v166 = vsel %vm164, %v165, %v76
    %v167 = vshrl.u32 %v166, 3
    %v168 = vand.u32 %v166, 7
    %v169 = vsub.s32 0, %v168
    %v170 = vsel %vm164, %v169, %v168
    %vm171 = vcmp.lt.s32.totalorder %v77, 0
    %v172 = vsub.s32 0, %v77
    %v173 = vsel %vm171, %v172, %v77
    %v174 = vshrl.u32 %v173, 3
    %v175 = vand.u32 %v173, 7
    %v176 = vsub.s32 0, %v175
    %v177 = vsel %vm171, %v176, %v175
    %vm178 = vcmp.lt.s32.totalorder %v78, 0
    %v179 = vsub.s32 0, %v78
    %v180 = vsel %vm178, %v179, %v78
    %v181 = vshrl.u32 %v180, 3
    %v182 = vand.u32 %v180, 7
    %v183 = vsub.s32 0, %v182
    %v184 = vsel %vm178, %v183, %v182
    %vm185 = vcmp.lt.s32.totalorder %v79, 0
    %v186 = vsub.s32 0, %v79
    %v187 = vsel %vm185, %v186, %v79
    %v188 = vshrl.u32 %v187, 3
    %v189 = vand.u32 %v187, 7
    %v190 = vsub.s32 0, %v189
    %v191 = vsel %vm185, %v190, %v189
    %vm192 = vcmp.ne.s32.totalorder %v86, 0
    %vm193 = vcmp.ne.s32.totalorder %v93, 0
    %vm194 = vcmp.ne.s32.totalorder %v100, 0
    %vm195 = vcmp.ne.s32.totalorder %v107, 0
    %vm196 = vcmp.ne.s32.totalorder %v114, 0
    %vm197 = vcmp.ne.s32.totalorder %v121, 0
    %vm198 = vcmp.ne.s32.totalorder %v128, 0
    %vm199 = vcmp.ne.s32.totalorder %v135, 0
    %vm200 = vcmp.ne.s32.totalorder %v142, 0
    %vm201 = vcmp.ne.s32.totalorder %v149, 0
    %vm202 = vcmp.ne.s32.totalorder %v156, 0
    %vm203 = vcmp.ne.s32.totalorder %v163, 0
    %vm204 = vcmp.ne.s32.totalorder %v170, 0
    %vm205 = vcmp.ne.s32.totalorder %v177, 0
    %vm206 = vcmp.ne.s32.totalorder %v184, 0
    %vm207 = vcmp.ne.s32.totalorder %v191, 0
    %vm208 = vcmp.lt.s32.totalorder %v86, 0
    %vm209 = vcmp.lt.s32.totalorder %v93, 0
    %vm210 = vcmp.lt.s32.totalorder %v100, 0
    %vm211 = vcmp.lt.s32.totalorder %v107, 0
    %vm212 = vcmp.lt.s32.totalorder %v114, 0
    %vm213 = vcmp.lt.s32.totalorder %v121, 0
    %vm214 = vcmp.lt.s32.totalorder %v128, 0
    %vm215 = vcmp.lt.s32.totalorder %v135, 0
    %vm216 = vcmp.lt.s32.totalorder %v142, 0
    %vm217 = vcmp.lt.s32.totalorder %v149, 0
    %vm218 = vcmp.lt.s32.totalorder %v156, 0
    %vm219 = vcmp.lt.s32.totalorder %v163, 0
    %vm220 = vcmp.lt.s32.totalorder %v170, 0
    %vm221 = vcmp.lt.s32.totalorder %v177, 0
    %vm222 = vcmp.lt.s32.totalorder %v184, 0
    %vm223 = vcmp.lt.s32.totalorder %v191, 0
    %vm224 = vmand %vm208, %vm192
    %vm225 = vmand %vm209, %vm193
    %vm226 = vmand %vm210, %vm194
    %vm227 = vmand %vm211, %vm195
    %vm228 = vmand %vm212, %vm196
    %vm229 = vmand %vm213, %vm197
    %vm230 = vmand %vm214, %vm198
    %vm231 = vmand %vm215, %vm199
    %vm232 = vmand %vm216, %vm200
    %vm233 = vmand %vm217, %vm201
    %vm234 = vmand %vm218, %vm202
    %vm235 = vmand %vm219, %vm203
    %vm236 = vmand %vm220, %vm204
    %vm237 = vmand %vm221, %vm205
    %vm238 = vmand %vm222, %vm206
    %vm239 = vmand %vm223, %vm207
    %v240 = vadd.s32 %v86, 8
    %v241 = vadd.s32 %v93, 8
    %v242 = vadd.s32 %v100, 8
    %v243 = vadd.s32 %v107, 8
    %v244 = vadd.s32 %v114, 8
    %v245 = vadd.s32 %v121, 8
    %v246 = vadd.s32 %v128, 8
    %v247 = vadd.s32 %v135, 8
    %v248 = vadd.s32 %v142, 8
    %v249 = vadd.s32 %v149, 8
    %v250 = vadd.s32 %v156, 8
    %v251 = vadd.s32 %v163, 8
    %v252 = vadd.s32 %v170, 8
    %v253 = vadd.s32 %v177, 8
    %v254 = vadd.s32 %v184, 8
    %v255 = vadd.s32 %v191, 8
    %v256 = vsel %vm224, %v240, %v86
    %v257 = vsel %vm225, %v241, %v93
    %v258 = vsel %vm226, %v242, %v100
    %v259 = vsel %vm227, %v243, %v107
    %v260 = vsel %vm228, %v244, %v114
    %v261 = vsel %vm229, %v245, %v121
    %v262 = vsel %vm230, %v246, %v128
    %v263 = vsel %vm231, %v247, %v135
    %v264 = vsel %vm232, %v248, %v142
    %v265 = vsel %vm233, %v249, %v149
    %v266 = vsel %vm234, %v250, %v156
    %v267 = vsel %vm235, %v251, %v163
    %v268 = vsel %vm236, %v252, %v170
    %v269 = vsel %vm237, %v253, %v177
    %v270 = vsel %vm238, %v254, %v184
    %v271 = vsel %vm239, %v255, %v191
    %v272 = vlaneseq
    %v273 = vand.u32 %v272, 127
    %vm274 = vcmp.eq.s32.totalorder %v256, %v273
    %vm275 = vcmp.eq.s32.totalorder %v257, %v273
    %vm276 = vcmp.eq.s32.totalorder %v258, %v273
    %vm277 = vcmp.eq.s32.totalorder %v259, %v273
    %vm278 = vcmp.eq.s32.totalorder %v260, %v273
    %vm279 = vcmp.eq.s32.totalorder %v261, %v273
    %vm280 = vcmp.eq.s32.totalorder %v262, %v273
    %vm281 = vcmp.eq.s32.totalorder %v263, %v273
    %vm282 = vcmp.eq.s32.totalorder %v264, %v273
    %vm283 = vcmp.eq.s32.totalorder %v265, %v273
    %vm284 = vcmp.eq.s32.totalorder %v266, %v273
    %vm285 = vcmp.eq.s32.totalorder %v267, %v273
    %vm286 = vcmp.eq.s32.totalorder %v268, %v273
    %vm287 = vcmp.eq.s32.totalorder %v269, %v273
    %vm288 = vcmp.eq.s32.totalorder %v270, %v273
    %vm289 = vcmp.eq.s32.totalorder %v271, %v273
    %v290 = vsel %vm274, 1, 0
    %v291 = vsel %vm275, 1, 0
    %v292 = vsel %vm276, 1, 0
    %v293 = vsel %vm277, 1, 0
    %v294 = vsel %vm278, 1, 0
    %v295 = vsel %vm279, 1, 0
    %v296 = vsel %vm280, 1, 0
    %v297 = vsel %vm281, 1, 0
    %v298 = vsel %vm282, 1, 0
    %v299 = vsel %vm283, 1, 0
    %v300 = vsel %vm284, 1, 0
    %v301 = vsel %vm285, 1, 0
    %v302 = vsel %vm286, 1, 0
    %v303 = vsel %vm287, 1, 0
    %v304 = vsel %vm288, 1, 0
    %v305 = vsel %vm289, 1, 0
    %v306 = vcvt.s32.f32 %v290
    %v307 = vcvt.s32.f32 %v291
    %v308 = vcvt.s32.f32 %v292
    %v309 = vcvt.s32.f32 %v293
    %v310 = vcvt.s32.f32 %v294
    %v311 = vcvt.s32.f32 %v295
    %v312 = vcvt.s32.f32 %v296
    %v313 = vcvt.s32.f32 %v297
    %v314 = vcvt.s32.f32 %v298
    %v315 = vcvt.s32.f32 %v299
    %v316 = vcvt.s32.f32 %v300
    %v317 = vcvt.s32.f32 %v301
    %v318 = vcvt.s32.f32 %v302
    %v319 = vcvt.s32.f32 %v303
    %v320 = vcvt.s32.f32 %v304
    %v321 = vcvt.s32.f32 %v305
    %vm322 = vcmp.lt.s32.totalorder %v273, 0
    %v323 = vsub.s32 0, %v273
    %v324 = vsel %vm322, %v323, %v273
    %v325 = vshrl.u32 %v324, 3
    %v326 = vand.u32 %v324, 7
    %v327 = vsub.s32 0, %v326
    %v328 = vsel %vm322, %v327, %v326
    %vm329 = vcmp.ne.s32.totalorder %v328, 0
    %vm330 = vcmp.lt.s32.totalorder %v328, 0
    %vm331 = vmand %vm330, %vm329
    %v332 = vadd.s32 %v328, 8
    %v333 = vsel %vm331, %v332, %v328
    %vm334 = vcmp.eq.s32.totalorder %v64, %v333
    %v335 = vsel %vm334, 1, 0
    %v336 = vcvt.s32.f32 %v335
    %v337 = vld [vmem:[%s0] sm:$0xf]
    %v338 = vld [vmem:[%s0 + $0x4] sm:$0xf]
    %v339 = vld [vmem:[%s0 + $0x8] sm:$0x1]
    %v340 = vld [vmem:[%s0 + $0xc] sm:$0xf]
    %v341 = vld [vmem:[%s0 + $0x10] sm:$0xf]
    %v342 = vld [vmem:[%s0 + $0x14] sm:$0x1]
    %v343 = vld [vmem:[#allocation2] sm:$0xf]
    %v344 = vld [vmem:[#allocation2 + $0x4] sm:$0xf]
    %v345 = vld [vmem:[#allocation2 + $0x8] sm:$0xf]
    %v346 = vld [vmem:[#allocation2 + $0xc] sm:$0xf]
    %v347 = vld [vmem:[#allocation2 + $0x10] sm:$0xf]
    %v348 = vld [vmem:[#allocation2 + $0x14] sm:$0xf]
    %v349 = vld [vmem:[#allocation2 + $0x18] sm:$0xf]
    %v350 = vld [vmem:[#allocation2 + $0x1c] sm:$0xf]
    %v351 = vld [vmem:[#allocation2 + $0x20] sm:$0xf]
    %v352 = vld [vmem:[#allocation2 + $0x24] sm:$0xf]
    %v353 = vld [vmem:[#allocation2 + $0x28] sm:$0xf]
    %v354 = vld [vmem:[#allocation2 + $0x2c] sm:$0xf]
    %v355 = vld [vmem:[#allocation2 + $0x30] sm:$0xf]
    %v356 = vld [vmem:[#allocation2 + $0x34] sm:$0xf]
    %v357 = vld [vmem:[#allocation2 + $0x38] sm:$0xf]
    %v358 = vld [vmem:[#allocation2 + $0x3c] sm:$0xf]
    %v359 = vld [vmem:[#allocation2 + $0x40] sm:$0xf]
    %v360 = vld [vmem:[#allocation2 + $0x44] sm:$0xf]
    %v361 = vld [vmem:[#allocation2 + $0x48] sm:$0xf]
    %v362 = vld [vmem:[#allocation2 + $0x4c] sm:$0xf]
    %v363 = vld [vmem:[#allocation2 + $0x50] sm:$0xf]
    %v364 = vld [vmem:[#allocation2 + $0x54] sm:$0xf]
    %v365 = vld [vmem:[#allocation2 + $0x58] sm:$0xf]
    %v366 = vld [vmem:[#allocation2 + $0x5c] sm:$0xf]
    %v367 = vld [vmem:[#allocation2 + $0x60] sm:$0xf]
    %v368 = vld [vmem:[#allocation2 + $0x64] sm:$0xf]
    %v369 = vld [vmem:[#allocation2 + $0x68] sm:$0xf]
    %v370 = vld [vmem:[#allocation2 + $0x6c] sm:$0xf]
    %v371 = vld [vmem:[#allocation2 + $0x70] sm:$0xf]
    %v372 = vld [vmem:[#allocation2 + $0x74] sm:$0xf]
    %v373 = vld [vmem:[#allocation2 + $0x78] sm:$0xf]
    %v374 = vld [vmem:[#allocation2 + $0x7c] sm:$0xf]
    %v375 = vld [vmem:[#allocation2 + $0x80] sm:$0xf]
    %v376 = vld [vmem:[#allocation2 + $0x84] sm:$0xf]
    %v377 = vld [vmem:[#allocation2 + $0x88] sm:$0xf]
    %v378 = vld [vmem:[#allocation2 + $0x8c] sm:$0xf]
    %v379 = vld [vmem:[#allocation2 + $0x90] sm:$0xf]
    %v380 = vld [vmem:[#allocation2 + $0x94] sm:$0xf]
    %v381 = vld [vmem:[#allocation2 + $0x98] sm:$0xf]
    %v382 = vld [vmem:[#allocation2 + $0x9c] sm:$0xf]
    %v383 = vld [vmem:[#allocation2 + $0xa0] sm:$0xf]
    %v384 = vld [vmem:[#allocation2 + $0xa4] sm:$0xf]
    %v385 = vld [vmem:[#allocation2 + $0xa8] sm:$0xf]
    %v386 = vld [vmem:[#allocation2 + $0xac] sm:$0xf]
    %v387 = vld [vmem:[#allocation2 + $0xb0] sm:$0xf]
    %v388 = vld [vmem:[#allocation2 + $0xb4] sm:$0xf]
    %v389 = vld [vmem:[#allocation2 + $0xb8] sm:$0xf]
    %v390 = vld [vmem:[#allocation2 + $0xbc] sm:$0xf]
    %v395 = vunpack.c.l.b16 %v337
    %v396 = vunpack.c.l.b16 %v338
    %v397 = vunpack.c.l.b16 %v340
    %v398 = vunpack.c.l.b16 %v341
    %v399 = vpack.c.b16 %v396, %v395
    %v400 = vpack.c.b16 %v398, %v397
    %v405 = vunpack.c.l.b16 %v339
    %v406 = vunpack.c.l.b16 %v342
    %v407 = vpack.c.b16 %v405, %v405
    %v408 = vpack.c.b16 %v406, %v406
    %vm409 = vsmask.f32 7424
    %v411 = vshrl.u32 %v399, 16
    %v413 = vshll.u32 %v399, 16
    %v415 = vrot.slane %v413, 1
    %v416 = vor.u32 %v411, %v415
    %v418 = vshll.u32 %v407, 16
    %v420 = vrot.slane %v418, 1
    %v421 = vsel %vm409, %v416, %v420
    %v423 = vshrl.u32 %v400, 16
    %v425 = vshll.u32 %v400, 16
    %v427 = vrot.slane %v425, 1
    %v428 = vor.u32 %v423, %v427
    %v430 = vshll.u32 %v408, 16
    %v432 = vrot.slane %v430, 1
    %v433 = vsel %vm409, %v428, %v432
    %vm436 = vcmask 1046528
    %v437 = vrot.slane %v399, 1
    %v438 = vrot.slane %v407, 1
    %v439 = vsel %vm436, %v437, %v438
    %v440 = vrot.slane %v400, 1
    %v441 = vrot.slane %v408, 1
    %v442 = vsel %vm436, %v440, %v441
    %v493 = vunpack.c.l.b16 %v343
    %v494 = vunpack.c.l.b16 %v344
    %v495 = vunpack.c.l.b16 %v345
    %v496 = vunpack.c.l.b16 %v346
    %v497 = vunpack.c.l.b16 %v347
    %v498 = vunpack.c.l.b16 %v348
    %v499 = vunpack.c.l.b16 %v349
    %v500 = vunpack.c.l.b16 %v350
    %v501 = vunpack.c.l.b16 %v351
    %v502 = vunpack.c.l.b16 %v352
    %v503 = vunpack.c.l.b16 %v353
    %v504 = vunpack.c.l.b16 %v354
    %v505 = vunpack.c.l.b16 %v355
    %v506 = vunpack.c.l.b16 %v356
    %v507 = vunpack.c.l.b16 %v357
    %v508 = vunpack.c.l.b16 %v358
    %v509 = vunpack.c.l.b16 %v359
    %v510 = vunpack.c.l.b16 %v360
    %v511 = vunpack.c.l.b16 %v361
    %v512 = vunpack.c.l.b16 %v362
    %v513 = vunpack.c.l.b16 %v363
    %v514 = vunpack.c.l.b16 %v364
    %v515 = vunpack.c.l.b16 %v365
    %v516 = vunpack.c.l.b16 %v366
    %v517 = vunpack.c.l.b16 %v367
    %v518 = vunpack.c.l.b16 %v368
    %v519 = vunpack.c.l.b16 %v369
    %v520 = vunpack.c.l.b16 %v370
    %v521 = vunpack.c.l.b16 %v371
    %v522 = vunpack.c.l.b16 %v372
    %v523 = vunpack.c.l.b16 %v373
    %v524 = vunpack.c.l.b16 %v374
    %v525 = vunpack.c.l.b16 %v375
    %v526 = vunpack.c.l.b16 %v376
    %v527 = vunpack.c.l.b16 %v377
    %v528 = vunpack.c.l.b16 %v378
    %v529 = vunpack.c.l.b16 %v379
    %v530 = vunpack.c.l.b16 %v380
    %v531 = vunpack.c.l.b16 %v381
    %v532 = vunpack.c.l.b16 %v382
    %v533 = vunpack.c.l.b16 %v383
    %v534 = vunpack.c.l.b16 %v384
    %v535 = vunpack.c.l.b16 %v385
    %v536 = vunpack.c.l.b16 %v386
    %v537 = vunpack.c.l.b16 %v387
    %v538 = vunpack.c.l.b16 %v388
    %v539 = vunpack.c.l.b16 %v389
    %v540 = vunpack.c.l.b16 %v390
    %v541 = vpack.c.b16 %v494, %v493
    %v542 = vpack.c.b16 %v496, %v495
    %v543 = vpack.c.b16 %v498, %v497
    %v544 = vpack.c.b16 %v500, %v499
    %v545 = vpack.c.b16 %v502, %v501
    %v546 = vpack.c.b16 %v504, %v503
    %v547 = vpack.c.b16 %v506, %v505
    %v548 = vpack.c.b16 %v508, %v507
    %v549 = vpack.c.b16 %v510, %v509
    %v550 = vpack.c.b16 %v512, %v511
    %v551 = vpack.c.b16 %v514, %v513
    %v552 = vpack.c.b16 %v516, %v515
    %v553 = vpack.c.b16 %v518, %v517
    %v554 = vpack.c.b16 %v520, %v519
    %v555 = vpack.c.b16 %v522, %v521
    %v556 = vpack.c.b16 %v524, %v523
    %v557 = vpack.c.b16 %v526, %v525
    %v558 = vpack.c.b16 %v528, %v527
    %v559 = vpack.c.b16 %v530, %v529
    %v560 = vpack.c.b16 %v532, %v531
    %v561 = vpack.c.b16 %v534, %v533
    %v562 = vpack.c.b16 %v536, %v535
    %v563 = vpack.c.b16 %v538, %v537
    %v564 = vpack.c.b16 %v540, %v539
    %589 = vmatpush.bf16.msra.mxu0 %v548
    %590 = vmatpush.bf16.msra.mxu0 %v547
    %591 = vmatpush.bf16.msra.mxu0 %v546
    %592 = vmatpush.bf16.msra.mxu0 %v545
    %593 = vmatpush.bf16.msra.mxu0 %v544
    %594 = vmatpush.bf16.msra.mxu0 %v543
    %595 = vmatpush.bf16.msra.mxu0 %v542
    %596 = vmatpush.bf16.msra.mxu0 %v541
    %597 = vmatmul.bf16.gmra.mxu0 %v399
    %v598 = vpop.f32.mrf.mxu0
    %v599 = vadd.f32 0.0, %v598
    %v600 = vpop.f32.mrf.mxu0
    %v601 = vadd.f32 0.0, %v600
    %602 = vmatmul.bf16.gmra.mxu0 %v400
    %v603 = vpop.f32.mrf.mxu0
    %v604 = vadd.f32 0.0, %v603
    %v605 = vpop.f32.mrf.mxu0
    %v606 = vadd.f32 0.0, %v605
    %607 = vdwg.mxu0
    %608 = vmatpush.bf16.msra.mxu0 %v556
    %609 = vmatpush.bf16.msra.mxu0 %v555
    %610 = vmatpush.bf16.msra.mxu0 %v554
    %611 = vmatpush.bf16.msra.mxu0 %v553
    %612 = vmatpush.bf16.msra.mxu0 %v552
    %613 = vmatpush.bf16.msra.mxu0 %v551
    %614 = vmatpush.bf16.msra.mxu0 %v550
    %615 = vmatpush.bf16.msra.mxu0 %v549
    %616 = vmatmul.bf16.gmra.mxu0 %v421
    %v617 = vpop.f32.mrf.mxu0
    %v618 = vadd.f32 %v599, %v617
    %v619 = vpop.f32.mrf.mxu0
    %v620 = vadd.f32 %v601, %v619
    %621 = vmatmul.bf16.gmra.mxu0 %v433
    %v622 = vpop.f32.mrf.mxu0
    %v623 = vadd.f32 %v604, %v622
    %v624 = vpop.f32.mrf.mxu0
    %v625 = vadd.f32 %v606, %v624
    %626 = vdwg.mxu0
    %627 = vmatpush.bf16.msra.mxu0 %v564
    %628 = vmatpush.bf16.msra.mxu0 %v563
    %629 = vmatpush.bf16.msra.mxu0 %v562
    %630 = vmatpush.bf16.msra.mxu0 %v561
    %631 = vmatpush.bf16.msra.mxu0 %v560
    %632 = vmatpush.bf16.msra.mxu0 %v559
    %633 = vmatpush.bf16.msra.mxu0 %v558
    %634 = vmatpush.bf16.msra.mxu0 %v557
    %635 = vmatmul.bf16.gmra.mxu0 %v439
    %v636 = vpop.f32.mrf.mxu0
    %v637 = vadd.f32 %v618, %v636
    %v638 = vpop.f32.mrf.mxu0
    %v639 = vadd.f32 %v620, %v638
    %640 = vmatmul.bf16.gmra.mxu0 %v442
    %v641 = vpop.f32.mrf.mxu0
    %v642 = vadd.f32 %v623, %v641
    %v643 = vpop.f32.mrf.mxu0
    %v644 = vadd.f32 %v625, %v643
    %645 = vdwg.mxu0
    %v646 = vld [vmem:[%s3] sm:$0x1]
    %v647 = vld [vmem:[%s4] sm:$0x1]
    %v648 = vadd.f32 %v637, %v639
    %v649 = vadd.f32 %v648, %v642
    %v650 = vadd.f32 %v649, %v644
    %v651 = vrot.slane %v650, 4
    %v652 = vadd.f32 %v650, %v651
    %v653 = vrot.slane %v652, 2
    %v654 = vadd.f32 %v652, %v653
    %v655 = vrot.slane %v654, 1
    %v656 = vadd.f32 %v654, %v655
    %657 = vmatpush.msra.mxu0 %v321
    %658 = vmatpush.msra.mxu0 %v320
    %659 = vmatpush.msra.mxu0 %v319
    %660 = vmatpush.msra.mxu0 %v318
    %661 = vmatpush.msra.mxu0 %v317
    %662 = vmatpush.msra.mxu0 %v316
    %663 = vmatpush.msra.mxu0 %v315
    %664 = vmatpush.msra.mxu0 %v314
    %665 = vmatpush.msra.mxu0 %v313
    %666 = vmatpush.msra.mxu0 %v312
    %667 = vmatpush.msra.mxu0 %v311
    %668 = vmatpush.msra.mxu0 %v310
    %669 = vmatpush.msra.mxu0 %v309
    %670 = vmatpush.msra.mxu0 %v308
    %671 = vmatpush.msra.mxu0 %v307
    %672 = vmatpush.msra.mxu0 %v306
    %673 = vmatmul.f32.gmra.mxu0 %v656
    %v674 = vpop.f32.mrf.mxu0
    %v675 = vadd.f32 0.0, %v674
    %676 = vdwg.mxu0
    %v677 = vmul.f32 %v675, 0.001953125
    %vm678 = vcmask 64512
    %v680 = vsel %vm678, %v677, 0
    %682 = vmatpush.msra.mxu0 0.0
    %683 = vmatpush.msra.mxu0 0.0
    %684 = vmatpush.msra.mxu0 0.0
    %685 = vmatpush.msra.mxu0 0.0
    %686 = vmatpush.msra.mxu0 0.0
    %687 = vmatpush.msra.mxu0 0.0
    %688 = vmatpush.msra.mxu0 0.0
    %689 = vmatpush.msra.mxu0 0.0
    %690 = vmatpush.msra.mxu0 0.0
    %691 = vmatpush.msra.mxu0 0.0
    %692 = vmatpush.msra.mxu0 0.0
    %693 = vmatpush.msra.mxu0 0.0
    %694 = vmatpush.msra.mxu0 0.0
    %695 = vmatpush.msra.mxu0 0.0
    %696 = vmatpush.msra.mxu0 0.0
    %697 = vmatpush.msra.mxu0 %v336
    %698 = vmatmul.f32.gmra.mxu0 %v680
    %v699 = vpop.f32.mrf.mxu0
    %v700 = vadd.f32 0.0, %v699
    %701 = vdwg.mxu0
    %v702 = vperm.slane %v700, 0
    %v703 = vsub.f32 %v637, %v702
    %v704 = vsub.f32 %v639, %v702
    %v705 = vsub.f32 %v642, %v702
    %v706 = vsub.f32 %v644, %v702
    %v707 = vmul.f32 %v703, %v703
    %v708 = vmul.f32 %v704, %v704
    %v709 = vmul.f32 %v705, %v705
    %v710 = vmul.f32 %v706, %v706
    %v711 = vadd.f32 %v707, %v708
    %v712 = vadd.f32 %v711, %v709
    %v713 = vadd.f32 %v712, %v710
    %v714 = vrot.slane %v713, 4
    %v715 = vadd.f32 %v713, %v714
    %v716 = vrot.slane %v715, 2
    %v717 = vadd.f32 %v715, %v716
    %v718 = vrot.slane %v717, 1
    %v719 = vadd.f32 %v717, %v718
    %720 = vmatpush.msra.mxu0 %v321
    %721 = vmatpush.msra.mxu0 %v320
    %722 = vmatpush.msra.mxu0 %v319
    %723 = vmatpush.msra.mxu0 %v318
    %724 = vmatpush.msra.mxu0 %v317
    %725 = vmatpush.msra.mxu0 %v316
    %726 = vmatpush.msra.mxu0 %v315
    %727 = vmatpush.msra.mxu0 %v314
    %728 = vmatpush.msra.mxu0 %v313
    %729 = vmatpush.msra.mxu0 %v312
    %730 = vmatpush.msra.mxu0 %v311
    %731 = vmatpush.msra.mxu0 %v310
    %732 = vmatpush.msra.mxu0 %v309
    %733 = vmatpush.msra.mxu0 %v308
    %734 = vmatpush.msra.mxu0 %v307
    %735 = vmatpush.msra.mxu0 %v306
    %736 = vmatmul.f32.gmra.mxu0 %v719
    %v737 = vpop.f32.mrf.mxu0
    %v738 = vadd.f32 0.0, %v737
    %739 = vdwg.mxu0
    %v740 = vmul.f32 %v738, 0.001953125
    %v741 = vadd.f32 %v740, 1e-05
    %v742 = vrsqrt.pop %v741
    %v743 = vmul.f32 %v742, %v741
    %v744 = vmul.f32 %v743, %v742
    %v745 = vmul.f32 0.5, %v744
    %v746 = vsub.f32 1.5, %v745
    %v747 = vmul.f32 %v742, %v746
    %vm748 = vweird.f32 %v741
    %vm749 = vweird.f32 %v742
    %vm750 = vmor %vm748, %vm749
    %v751 = vsel %vm750, %v742, %v747
    %v753 = vsel %vm678, %v751, 0
    %755 = vmatpush.msra.mxu0 0.0
    %756 = vmatpush.msra.mxu0 0.0
    %757 = vmatpush.msra.mxu0 0.0
    %758 = vmatpush.msra.mxu0 0.0
    %759 = vmatpush.msra.mxu0 0.0
    %760 = vmatpush.msra.mxu0 0.0
    %761 = vmatpush.msra.mxu0 0.0
    %762 = vmatpush.msra.mxu0 0.0
    %763 = vmatpush.msra.mxu0 0.0
    %764 = vmatpush.msra.mxu0 0.0
    %765 = vmatpush.msra.mxu0 0.0
    %766 = vmatpush.msra.mxu0 0.0
    %767 = vmatpush.msra.mxu0 0.0
    %768 = vmatpush.msra.mxu0 0.0
    %769 = vmatpush.msra.mxu0 0.0
    %770 = vmatpush.msra.mxu0 %v336
    %771 = vmatmul.f32.gmra.mxu0 %v753
    %v772 = vpop.f32.mrf.mxu0
    %v773 = vadd.f32 0.0, %v772
    %774 = vdwg.mxu0
    %v775 = vmul.f32 %v773, %v646
    %v776 = vperm.slane %v775, 0
    %v777 = vmul.f32 %v703, %v776
    %v778 = vmul.f32 %v704, %v776
    %v779 = vmul.f32 %v705, %v776
    %v780 = vmul.f32 %v706, %v776
    %v782 = vperm.slane %v647, 0
    %v784 = vadd.f32 %v777, %v782
    %v785 = vadd.f32 %v778, %v782
    %v786 = vadd.f32 %v779, %v782
    %v787 = vadd.f32 %v780, %v782
    %v788 = vmax.f32 %v784, 0.0
    %v789 = vmax.f32 %v785, 0.0
    %v790 = vmax.f32 %v786, 0.0
    %v791 = vmax.f32 %v787, 0.0
    %v792 = vpack.c.bf16 %v788, %v788
    %v793 = vpack.c.bf16 %v789, %v789
    %v794 = vpack.c.bf16 %v790, %v790
    %v795 = vpack.c.bf16 %v791, %v791
    %v800 = vunpack.c.l.b16 %v792
    %v801 = vunpack.c.l.b16 %v793
    %v802 = vunpack.c.l.b16 %v794
    %v803 = vunpack.c.l.b16 %v795
    %v804 = vpack.c.b16 %v801, %v800
    %v805 = vpack.c.b16 %v803, %v802
    %v807 = vshrl.u32 %v804, 16
    %v809 = vrot.slane %v807, 7
    %v810 = vshll.u32 %v804, 16
    %v812 = vor.u32 %v809, %v810
    %v814 = vshrl.u32 %v805, 16
    %v816 = vrot.slane %v814, 7
    %v817 = vshll.u32 %v805, 16
    %v819 = vor.u32 %v816, %v817
    %vm824 = vcmask 1040384
    %vm825 = vsmask.f32 256
    %vm826 = vmand %vm824, %vm825
    %v827 = vsel %vm826, 0, %v812
    %v828 = vsel %vm826, 0, %v819
    %v829 = vsel %vm826, %v809, 0
    %v830 = vsel %vm826, %v816, 0
    %v831 = vld [vmem:[#allocation5] sm:$0xf]
    %v832 = vld [vmem:[#allocation5 + $0x4] sm:$0xf]
    %v833 = vld [vmem:[#allocation5 + $0x8] sm:$0xf]
    %v834 = vld [vmem:[#allocation5 + $0xc] sm:$0xf]
    %v835 = vld [vmem:[#allocation5 + $0x10] sm:$0xf]
    %v836 = vld [vmem:[#allocation5 + $0x14] sm:$0xf]
    %v837 = vld [vmem:[#allocation5 + $0x18] sm:$0xf]
    %v838 = vld [vmem:[#allocation5 + $0x1c] sm:$0xf]
    %v839 = vld [vmem:[#allocation5 + $0x20] sm:$0xf]
    %v840 = vld [vmem:[#allocation5 + $0x24] sm:$0xf]
    %v841 = vld [vmem:[#allocation5 + $0x28] sm:$0xf]
    %v842 = vld [vmem:[#allocation5 + $0x2c] sm:$0xf]
    %v843 = vld [vmem:[#allocation5 + $0x30] sm:$0xf]
    %v844 = vld [vmem:[#allocation5 + $0x34] sm:$0xf]
    %v845 = vld [vmem:[#allocation5 + $0x38] sm:$0xf]
    %v846 = vld [vmem:[#allocation5 + $0x3c] sm:$0xf]
    %v847 = vld [vmem:[#allocation5 + $0x40] sm:$0xf]
    %v848 = vld [vmem:[#allocation5 + $0x44] sm:$0xf]
    %v849 = vld [vmem:[#allocation5 + $0x48] sm:$0xf]
    %v850 = vld [vmem:[#allocation5 + $0x4c] sm:$0xf]
    %v851 = vld [vmem:[#allocation5 + $0x50] sm:$0xf]
    %v852 = vld [vmem:[#allocation5 + $0x54] sm:$0xf]
    %v853 = vld [vmem:[#allocation5 + $0x58] sm:$0xf]
    %v854 = vld [vmem:[#allocation5 + $0x5c] sm:$0xf]
    %v855 = vld [vmem:[#allocation5 + $0x60] sm:$0xf]
    %v856 = vld [vmem:[#allocation5 + $0x64] sm:$0xf]
    %v857 = vld [vmem:[#allocation5 + $0x68] sm:$0xf]
    %v858 = vld [vmem:[#allocation5 + $0x6c] sm:$0xf]
    %v859 = vld [vmem:[#allocation5 + $0x70] sm:$0xf]
    %v860 = vld [vmem:[#allocation5 + $0x74] sm:$0xf]
    %v861 = vld [vmem:[#allocation5 + $0x78] sm:$0xf]
    %v862 = vld [vmem:[#allocation5 + $0x7c] sm:$0xf]
    %v863 = vld [vmem:[#allocation5 + $0x80] sm:$0xf]
    %v864 = vld [vmem:[#allocation5 + $0x84] sm:$0xf]
    %v865 = vld [vmem:[#allocation5 + $0x88] sm:$0xf]
    %v866 = vld [vmem:[#allocation5 + $0x8c] sm:$0xf]
    %v867 = vld [vmem:[#allocation5 + $0x90] sm:$0xf]
    %v868 = vld [vmem:[#allocation5 + $0x94] sm:$0xf]
    %v869 = vld [vmem:[#allocation5 + $0x98] sm:$0xf]
    %v870 = vld [vmem:[#allocation5 + $0x9c] sm:$0xf]
    %v871 = vld [vmem:[#allocation5 + $0xa0] sm:$0xf]
    %v872 = vld [vmem:[#allocation5 + $0xa4] sm:$0xf]
    %v873 = vld [vmem:[#allocation5 + $0xa8] sm:$0xf]
    %v874 = vld [vmem:[#allocation5 + $0xac] sm:$0xf]
    %v875 = vld [vmem:[#allocation5 + $0xb0] sm:$0xf]
    %v876 = vld [vmem:[#allocation5 + $0xb4] sm:$0xf]
    %v877 = vld [vmem:[#allocation5 + $0xb8] sm:$0xf]
    %v878 = vld [vmem:[#allocation5 + $0xbc] sm:$0xf]
    %v880 = vshrl.u32 %v827, 16
    %v882 = vshll.u32 %v827, 16
    %v884 = vrot.slane %v882, 1
    %v885 = vor.u32 %v880, %v884
    %v887 = vshll.u32 %v829, 16
    %v889 = vrot.slane %v887, 1
    %v890 = vsel %vm409, %v885, %v889
    %v892 = vshrl.u32 %v828, 16
    %v894 = vshll.u32 %v828, 16
    %v896 = vrot.slane %v894, 1
    %v897 = vor.u32 %v892, %v896
    %v899 = vshll.u32 %v830, 16
    %v901 = vrot.slane %v899, 1
    %v902 = vsel %vm409, %v897, %v901
    %v909 = vrot.slane %v827, 1
    %v910 = vrot.slane %v829, 1
    %v911 = vsel %vm436, %v909, %v910
    %v912 = vrot.slane %v828, 1
    %v913 = vrot.slane %v830, 1
    %v914 = vsel %vm436, %v912, %v913
    %v965 = vunpack.c.l.b16 %v831
    %v966 = vunpack.c.l.b16 %v832
    %v967 = vunpack.c.l.b16 %v833
    %v968 = vunpack.c.l.b16 %v834
    %v969 = vunpack.c.l.b16 %v835
    %v970 = vunpack.c.l.b16 %v836
    %v971 = vunpack.c.l.b16 %v837
    %v972 = vunpack.c.l.b16 %v838
    %v973 = vunpack.c.l.b16 %v839
    %v974 = vunpack.c.l.b16 %v840
    %v975 = vunpack.c.l.b16 %v841
    %v976 = vunpack.c.l.b16 %v842
    %v977 = vunpack.c.l.b16 %v843
    %v978 = vunpack.c.l.b16 %v844
    %v979 = vunpack.c.l.b16 %v845
    %v980 = vunpack.c.l.b16 %v846
    %v981 = vunpack.c.l.b16 %v847
    %v982 = vunpack.c.l.b16 %v848
    %v983 = vunpack.c.l.b16 %v849
    %v984 = vunpack.c.l.b16 %v850
    %v985 = vunpack.c.l.b16 %v851
    %v986 = vunpack.c.l.b16 %v852
    %v987 = vunpack.c.l.b16 %v853
    %v988 = vunpack.c.l.b16 %v854
    %v989 = vunpack.c.l.b16 %v855
    %v990 = vunpack.c.l.b16 %v856
    %v991 = vunpack.c.l.b16 %v857
    %v992 = vunpack.c.l.b16 %v858
    %v993 = vunpack.c.l.b16 %v859
    %v994 = vunpack.c.l.b16 %v860
    %v995 = vunpack.c.l.b16 %v861
    %v996 = vunpack.c.l.b16 %v862
    %v997 = vunpack.c.l.b16 %v863
    %v998 = vunpack.c.l.b16 %v864
    %v999 = vunpack.c.l.b16 %v865
    %v1000 = vunpack.c.l.b16 %v866
    %v1001 = vunpack.c.l.b16 %v867
    %v1002 = vunpack.c.l.b16 %v868
    %v1003 = vunpack.c.l.b16 %v869
    %v1004 = vunpack.c.l.b16 %v870
    %v1005 = vunpack.c.l.b16 %v871
    %v1006 = vunpack.c.l.b16 %v872
    %v1007 = vunpack.c.l.b16 %v873
    %v1008 = vunpack.c.l.b16 %v874
    %v1009 = vunpack.c.l.b16 %v875
    %v1010 = vunpack.c.l.b16 %v876
    %v1011 = vunpack.c.l.b16 %v877
    %v1012 = vunpack.c.l.b16 %v878
    %v1013 = vpack.c.b16 %v966, %v965
    %v1014 = vpack.c.b16 %v968, %v967
    %v1015 = vpack.c.b16 %v970, %v969
    %v1016 = vpack.c.b16 %v972, %v971
    %v1017 = vpack.c.b16 %v974, %v973
    %v1018 = vpack.c.b16 %v976, %v975
    %v1019 = vpack.c.b16 %v978, %v977
    %v1020 = vpack.c.b16 %v980, %v979
    %v1021 = vpack.c.b16 %v982, %v981
    %v1022 = vpack.c.b16 %v984, %v983
    %v1023 = vpack.c.b16 %v986, %v985
    %v1024 = vpack.c.b16 %v988, %v987
    %v1025 = vpack.c.b16 %v990, %v989
    %v1026 = vpack.c.b16 %v992, %v991
    %v1027 = vpack.c.b16 %v994, %v993
    %v1028 = vpack.c.b16 %v996, %v995
    %v1029 = vpack.c.b16 %v998, %v997
    %v1030 = vpack.c.b16 %v1000, %v999
    %v1031 = vpack.c.b16 %v1002, %v1001
    %v1032 = vpack.c.b16 %v1004, %v1003
    %v1033 = vpack.c.b16 %v1006, %v1005
    %v1034 = vpack.c.b16 %v1008, %v1007
    %v1035 = vpack.c.b16 %v1010, %v1009
    %v1036 = vpack.c.b16 %v1012, %v1011
    %1061 = vmatpush.bf16.msra.mxu0 %v1020
    %1062 = vmatpush.bf16.msra.mxu0 %v1019
    %1063 = vmatpush.bf16.msra.mxu0 %v1018
    %1064 = vmatpush.bf16.msra.mxu0 %v1017
    %1065 = vmatpush.bf16.msra.mxu0 %v1016
    %1066 = vmatpush.bf16.msra.mxu0 %v1015
    %1067 = vmatpush.bf16.msra.mxu0 %v1014
    %1068 = vmatpush.bf16.msra.mxu0 %v1013
    %1069 = vmatmul.bf16.gmra.mxu0 %v827
    %v1070 = vpop.f32.mrf.mxu0
    %v1071 = vadd.f32 0.0, %v1070
    %v1072 = vpop.f32.mrf.mxu0
    %v1073 = vadd.f32 0.0, %v1072
    %1074 = vmatmul.bf16.gmra.mxu0 %v828
    %v1075 = vpop.f32.mrf.mxu0
    %v1076 = vadd.f32 0.0, %v1075
    %v1077 = vpop.f32.mrf.mxu0
    %v1078 = vadd.f32 0.0, %v1077
    %1079 = vdwg.mxu0
    %1080 = vmatpush.bf16.msra.mxu0 %v1028
    %1081 = vmatpush.bf16.msra.mxu0 %v1027
    %1082 = vmatpush.bf16.msra.mxu0 %v1026
    %1083 = vmatpush.bf16.msra.mxu0 %v1025
    %1084 = vmatpush.bf16.msra.mxu0 %v1024
    %1085 = vmatpush.bf16.msra.mxu0 %v1023
    %1086 = vmatpush.bf16.msra.mxu0 %v1022
    %1087 = vmatpush.bf16.msra.mxu0 %v1021
    %1088 = vmatmul.bf16.gmra.mxu0 %v890
    %v1089 = vpop.f32.mrf.mxu0
    %v1090 = vadd.f32 %v1071, %v1089
    %v1091 = vpop.f32.mrf.mxu0
    %v1092 = vadd.f32 %v1073, %v1091
    %1093 = vmatmul.bf16.gmra.mxu0 %v902
    %v1094 = vpop.f32.mrf.mxu0
    %v1095 = vadd.f32 %v1076, %v1094
    %v1096 = vpop.f32.mrf.mxu0
    %v1097 = vadd.f32 %v1078, %v1096
    %1098 = vdwg.mxu0
    %1099 = vmatpush.bf16.msra.mxu0 %v1036
    %1100 = vmatpush.bf16.msra.mxu0 %v1035
    %1101 = vmatpush.bf16.msra.mxu0 %v1034
    %1102 = vmatpush.bf16.msra.mxu0 %v1033
    %1103 = vmatpush.bf16.msra.mxu0 %v1032
    %1104 = vmatpush.bf16.msra.mxu0 %v1031
    %1105 = vmatpush.bf16.msra.mxu0 %v1030
    %1106 = vmatpush.bf16.msra.mxu0 %v1029
    %1107 = vmatmul.bf16.gmra.mxu0 %v911
    %v1108 = vpop.f32.mrf.mxu0
    %v1109 = vadd.f32 %v1090, %v1108
    %v1110 = vpop.f32.mrf.mxu0
    %v1111 = vadd.f32 %v1092, %v1110
    %1112 = vmatmul.bf16.gmra.mxu0 %v914
    %v1113 = vpop.f32.mrf.mxu0
    %v1114 = vadd.f32 %v1095, %v1113
    %v1115 = vpop.f32.mrf.mxu0
    %v1116 = vadd.f32 %v1097, %v1115
    %1117 = vdwg.mxu0
    %v1118 = vld [vmem:[%s6] sm:$0x1]
    %v1119 = vld [vmem:[%s7] sm:$0x1]
    %v1120 = vadd.f32 %v1109, %v1111
    %v1121 = vadd.f32 %v1120, %v1114
    %v1122 = vadd.f32 %v1121, %v1116
    %v1123 = vrot.slane %v1122, 4
    %v1124 = vadd.f32 %v1122, %v1123
    %v1125 = vrot.slane %v1124, 2
    %v1126 = vadd.f32 %v1124, %v1125
    %v1127 = vrot.slane %v1126, 1
    %v1128 = vadd.f32 %v1126, %v1127
    %1129 = vmatpush.msra.mxu0 %v321
    %1130 = vmatpush.msra.mxu0 %v320
    %1131 = vmatpush.msra.mxu0 %v319
    %1132 = vmatpush.msra.mxu0 %v318
    %1133 = vmatpush.msra.mxu0 %v317
    %1134 = vmatpush.msra.mxu0 %v316
    %1135 = vmatpush.msra.mxu0 %v315
    %1136 = vmatpush.msra.mxu0 %v314
    %1137 = vmatpush.msra.mxu0 %v313
    %1138 = vmatpush.msra.mxu0 %v312
    %1139 = vmatpush.msra.mxu0 %v311
    %1140 = vmatpush.msra.mxu0 %v310
    %1141 = vmatpush.msra.mxu0 %v309
    %1142 = vmatpush.msra.mxu0 %v308
    %1143 = vmatpush.msra.mxu0 %v307
    %1144 = vmatpush.msra.mxu0 %v306
    %1145 = vmatmul.f32.gmra.mxu0 %v1128
    %v1146 = vpop.f32.mrf.mxu0
    %v1147 = vadd.f32 0.0, %v1146
    %1148 = vdwg.mxu0
    %v1149 = vmul.f32 %v1147, 0.001953125
    %v1151 = vsel %vm678, %v1149, 0
    %1153 = vmatpush.msra.mxu0 0.0
    %1154 = vmatpush.msra.mxu0 0.0
    %1155 = vmatpush.msra.mxu0 0.0
    %1156 = vmatpush.msra.mxu0 0.0
    %1157 = vmatpush.msra.mxu0 0.0
    %1158 = vmatpush.msra.mxu0 0.0
    %1159 = vmatpush.msra.mxu0 0.0
    %1160 = vmatpush.msra.mxu0 0.0
    %1161 = vmatpush.msra.mxu0 0.0
    %1162 = vmatpush.msra.mxu0 0.0
    %1163 = vmatpush.msra.mxu0 0.0
    %1164 = vmatpush.msra.mxu0 0.0
    %1165 = vmatpush.msra.mxu0 0.0
    %1166 = vmatpush.msra.mxu0 0.0
    %1167 = vmatpush.msra.mxu0 0.0
    %1168 = vmatpush.msra.mxu0 %v336
    %1169 = vmatmul.f32.gmra.mxu0 %v1151
    %v1170 = vpop.f32.mrf.mxu0
    %v1171 = vadd.f32 0.0, %v1170
    %1172 = vdwg.mxu0
    %v1173 = vperm.slane %v1171, 0
    %v1174 = vsub.f32 %v1109, %v1173
    %v1175 = vsub.f32 %v1111, %v1173
    %v1176 = vsub.f32 %v1114, %v1173
    %v1177 = vsub.f32 %v1116, %v1173
    %v1178 = vmul.f32 %v1174, %v1174
    %v1179 = vmul.f32 %v1175, %v1175
    %v1180 = vmul.f32 %v1176, %v1176
    %v1181 = vmul.f32 %v1177, %v1177
    %v1182 = vadd.f32 %v1178, %v1179
    %v1183 = vadd.f32 %v1182, %v1180
    %v1184 = vadd.f32 %v1183, %v1181
    %v1185 = vrot.slane %v1184, 4
    %v1186 = vadd.f32 %v1184, %v1185
    %v1187 = vrot.slane %v1186, 2
    %v1188 = vadd.f32 %v1186, %v1187
    %v1189 = vrot.slane %v1188, 1
    %v1190 = vadd.f32 %v1188, %v1189
    %1191 = vmatpush.msra.mxu0 %v321
    %1192 = vmatpush.msra.mxu0 %v320
    %1193 = vmatpush.msra.mxu0 %v319
    %1194 = vmatpush.msra.mxu0 %v318
    %1195 = vmatpush.msra.mxu0 %v317
    %1196 = vmatpush.msra.mxu0 %v316
    %1197 = vmatpush.msra.mxu0 %v315
    %1198 = vmatpush.msra.mxu0 %v314
    %1199 = vmatpush.msra.mxu0 %v313
    %1200 = vmatpush.msra.mxu0 %v312
    %1201 = vmatpush.msra.mxu0 %v311
    %1202 = vmatpush.msra.mxu0 %v310
    %1203 = vmatpush.msra.mxu0 %v309
    %1204 = vmatpush.msra.mxu0 %v308
    %1205 = vmatpush.msra.mxu0 %v307
    %1206 = vmatpush.msra.mxu0 %v306
    %1207 = vmatmul.f32.gmra.mxu0 %v1190
    %v1208 = vpop.f32.mrf.mxu0
    %v1209 = vadd.f32 0.0, %v1208
    %1210 = vdwg.mxu0
    %v1211 = vmul.f32 %v1209, 0.001953125
    %v1212 = vadd.f32 %v1211, 1e-05
    %v1213 = vrsqrt.pop %v1212
    %v1214 = vmul.f32 %v1213, %v1212
    %v1215 = vmul.f32 %v1214, %v1213
    %v1216 = vmul.f32 0.5, %v1215
    %v1217 = vsub.f32 1.5, %v1216
    %v1218 = vmul.f32 %v1213, %v1217
    %vm1219 = vweird.f32 %v1212
    %vm1220 = vweird.f32 %v1213
    %vm1221 = vmor %vm1219, %vm1220
    %v1222 = vsel %vm1221, %v1213, %v1218
    %v1224 = vsel %vm678, %v1222, 0
    %1226 = vmatpush.msra.mxu0 0.0
    %1227 = vmatpush.msra.mxu0 0.0
    %1228 = vmatpush.msra.mxu0 0.0
    %1229 = vmatpush.msra.mxu0 0.0
    %1230 = vmatpush.msra.mxu0 0.0
    %1231 = vmatpush.msra.mxu0 0.0
    %1232 = vmatpush.msra.mxu0 0.0
    %1233 = vmatpush.msra.mxu0 0.0
    %1234 = vmatpush.msra.mxu0 0.0
    %1235 = vmatpush.msra.mxu0 0.0
    %1236 = vmatpush.msra.mxu0 0.0
    %1237 = vmatpush.msra.mxu0 0.0
    %1238 = vmatpush.msra.mxu0 0.0
    %1239 = vmatpush.msra.mxu0 0.0
    %1240 = vmatpush.msra.mxu0 0.0
    %1241 = vmatpush.msra.mxu0 %v336
    %1242 = vmatmul.f32.gmra.mxu0 %v1224
    %v1243 = vpop.f32.mrf.mxu0
    %v1244 = vadd.f32 0.0, %v1243
    %1245 = vdwg.mxu0
    %v1246 = vmul.f32 %v1244, %v1118
    %v1247 = vperm.slane %v1246, 0
    %v1248 = vmul.f32 %v1174, %v1247
    %v1249 = vmul.f32 %v1175, %v1247
    %v1250 = vmul.f32 %v1176, %v1247
    %v1251 = vmul.f32 %v1177, %v1247
    %v1253 = vperm.slane %v1119, 0
    %v1255 = vadd.f32 %v1248, %v1253
    %v1256 = vadd.f32 %v1249, %v1253
    %v1257 = vadd.f32 %v1250, %v1253
    %v1258 = vadd.f32 %v1251, %v1253
    %v1259 = vld [vmem:[%s1] sm:$0xff]
    %v1260 = vld [vmem:[%s1 + $0x8] sm:$0xff]
    %v1261 = vld [vmem:[%s1 + $0x10] sm:$0xff]
    %v1262 = vld [vmem:[%s1 + $0x18] sm:$0xff]
    %v1263 = vadd.f32 %v1255, %v1259
    %v1264 = vadd.f32 %v1256, %v1260
    %v1265 = vadd.f32 %v1257, %v1261
    %v1266 = vadd.f32 %v1258, %v1262
    %v1267 = vmax.f32 %v1263, 0.0
    %v1268 = vmax.f32 %v1264, 0.0
    %v1269 = vmax.f32 %v1265, 0.0
    %v1270 = vmax.f32 %v1266, 0.0
    %1271 = vst [vmem:[#allocation7] sm:$0xff] %v1267
    %1272 = vst [vmem:[#allocation7 + $0x8] sm:$0xff] %v1268
    %1273 = vst [vmem:[#allocation7 + $0x10] sm:$0xff] %v1269
    %1274 = vst [vmem:[#allocation7 + $0x18] sm:$0xff] %v1270
    // Predicated region
    $region42: #{tpu_custom_call.1} parent=1 // pred_check
      _
    $region43: #{tpu_custom_call.1} parent=1 // pred_check_branch
      %1276 = sbr.rel (0) target = $region45
    $region44: #{tpu_custom_call.1} parent=1 // pred_region
      %1278 = vsyncadd [#allocation4], 0
      %s1279 = sshll.u32 [#allocation7], 4
      %s1280 = int_to_ptr.vmem [resolvable:$true] %s1279
      %s1281 = sshll.u32 %s8, 4
      %s1282 = int_to_ptr.hbm [resolvable:$true] %s1281
      %1287 = dma.vmem_to_hbm [thread:$0]  %s1280, 512, %s1282, [#allocation4], 128, 128, 8
    $region45: #{tpu_custom_call.1} parent=1 // pred_fallthru
      _
    // Predicated region
    $region46: #{tpu_custom_call.1} parent=1 // pred_check
      _
    $region47: #{tpu_custom_call.1} parent=1 // pred_check_branch
      %1289 = sbr.rel (0) target = $region49
    $region48: #{tpu_custom_call.1} parent=1 // pred_region
      %1291 = dma.done [#allocation4], 512
    $region49: #{tpu_custom_call.1} parent=1 // pred_fallthru
      _
    %1292 = vsyncpa [#allocation3], 1
    %1293 = vsyncpa [#allocation6], 1
    %1294 = vsyncpa [#allocation4], 1

</llo_original>
